<compile_context>
chip_gen: v5e
topology: v5e:2x2
jax: 0.10.0
libtpu: 0.0.40
codegen_flags: <defaults>
</compile_context>

<pallas_src>
import jax
import jax.numpy as jnp
from jax.experimental import pallas as pl
from jax.experimental.pallas import tpu as pltpu


def dual_attention_kernel(x_ref, wsp_ref, bsp_ref, ca_ref, o_ref):
    x = x_ref[0]                                   # (C, T) — current HW tile
    w = wsp_ref[...]                               # (C, 1) — resident spatial weights

    # Spatial-attention logits: VPU broadcast-mul + XLU sublane reduce over C.
    # Lane (HW) padding on the ragged last tile only affects padded lanes,
    # whose stores are masked, so correctness is unaffected.
    logits = jnp.sum(x * w, axis=0, keepdims=True) + bsp_ref[0]   # (1, T)
    a = jax.nn.sigmoid(logits)                                    # (1, T), lane-dense

    # Precomputed channel-attention gate for this batch element: (C, 1).
    ca = ca_ref[0]

    # out = (x * spatial) * channel — single lane-dense (C, T) store.
    o_ref[0] = (x * a * ca).astype(o_ref.dtype)


def _choose_hw_tile(HW, C, bytes_per_elem=4,
                    target_bytes=4 * 1024 * 1024, min_lanes=512):
    """Lane-dense HW tile: always a multiple of 128 (Pallas pads/masks the
    ragged last block).  ~target_bytes per x block, with a 512-lane floor so
    each strided DMA row stays >= 2 KiB even for large C."""
    lanes_from_budget = (target_bytes // (bytes_per_elem * max(C, 1))) // 128 * 128
    lanes = max(128, min_lanes, lanes_from_budget)
    hw_ceil = ((HW + 127) // 128) * 128            # no point exceeding padded extent
    return min(lanes, hw_ceil)


@jax.jit
def dual_attention_block(x_nchw, params):
    """x_nchw: (N, C, H, W) float32.  params: dict of weights (see init_params)."""
    N, C, H, W = x_nchw.shape
    HW = H * W
    itemsize = jnp.dtype(x_nchw.dtype).itemsize

    # ---- channel attention (tiny, batched, outside the hot kernel) ----
    pooled = jnp.mean(x_nchw, axis=(2, 3))                              # (N, C)
    h = jnp.maximum(pooled @ params["w1"] + params["b1"], 0.0)          # (N, mid)
    ca = jax.nn.sigmoid(h @ params["w2"] + params["b2"])                # (N, C)
    ca3 = ca.reshape(N, C, 1)                                           # (N, C, 1)

    # ---- main kernel: NCHW layout, tiled over HW ----
    x_flat = x_nchw.reshape(N, C, HW)        # metadata-only reshape (no transpose)
    hw_tile = _choose_hw_tile(HW, C, bytes_per_elem=itemsize)
    num_hw_tiles = pl.cdiv(HW, hw_tile)

    # VMEM budget: double-buffered in + out blocks, residents, plus headroom.
    # Cap at 48 MiB so it is valid on v7x's 64 MiB physical VMEM; v5e/v6e have
    # 128 MiB physical, so raising their 16/32 MiB scoped default is free.
    block_bytes = C * hw_tile * itemsize
    vmem_limit = int(min(48 * 1024 * 1024,
                         max(32 * 1024 * 1024, 6 * block_bytes + (8 << 20))))

    # Advisory cost estimate for the custom call (scheduling hint only).
    cost = pl.CostEstimate(
        flops=int(4 * N * C * HW),
        transcendentals=int(N * HW),
        bytes_accessed=int((2 * N * C * HW + N * C + C + 1) * itemsize),
    )

    out = pl.pallas_call(
        dual_attention_kernel,
        out_shape=jax.ShapeDtypeStruct((N, C, HW), x_nchw.dtype),
        grid_spec=pltpu.PrefetchScalarGridSpec(
            num_scalar_prefetch=0,
            grid=(N, num_hw_tiles),
            in_specs=[
                pl.BlockSpec((1, C, hw_tile), lambda n, t: (n, 0, t)),   # x tile
                pl.BlockSpec((C, 1), lambda n, t: (0, 0)),               # w_sp (resident)
                pl.BlockSpec(memory_space=pltpu.MemorySpace.SMEM),       # b_sp scalar
                pl.BlockSpec((1, C, 1), lambda n, t: (n, 0, 0)),         # ca gate
            ],
            out_specs=pl.BlockSpec((1, C, hw_tile), lambda n, t: (n, 0, t)),
        ),
        compiler_params=pltpu.CompilerParams(
            dimension_semantics=("parallel", "parallel"),
            vmem_limit_bytes=vmem_limit),
        cost_estimate=cost,
    )(x_flat, params["w_sp"], params["b_sp"], ca3)

    return out.reshape(N, C, H, W)           # metadata-only reshape back


def init_params(key, in_channels):
    """Deterministic synthetic params matching the PyTorch module shapes.

    PyTorch 1x1 Conv2d weights have shape (out, in, 1, 1); here stored as (in, out)
    matmul matrices (i.e. transposed, with the trailing 1x1 squeezed out).
    """
    mid = in_channels // 16
    assert mid >= 1, "in_channels must be >= 16 (matches in_channels // 16 in the module)"
    k = jax.random.split(key, 6)
    scale = 0.1
    return {
        "w_sp": scale * jax.random.normal(k[0], (in_channels, 1), jnp.float32),
        "b_sp": scale * jax.random.normal(k[1], (1,), jnp.float32),
        "w1":   scale * jax.random.normal(k[2], (in_channels, mid), jnp.float32),
        "b1":   scale * jax.random.normal(k[3], (1, mid), jnp.float32),
        "w2":   scale * jax.random.normal(k[4], (mid, in_channels), jnp.float32),
        "b2":   scale * jax.random.normal(k[5], (1, in_channels), jnp.float32),
    }


def reference_forward(x_nchw, params):
    """Plain-JAX reference reproducing the PyTorch forward (for a sanity check)."""
    logits = jnp.einsum("nchw,c->nhw", x_nchw, params["w_sp"][:, 0]) + params["b_sp"][0]
    a = jax.nn.sigmoid(logits)[:, None, :, :]                 # (N,1,H,W)
    sa = x_nchw * a
    p = jnp.mean(x_nchw, axis=(2, 3))                         # (N, C)
    h = jnp.maximum(p @ params["w1"] + params["b1"], 0.0)
    ca = jax.nn.sigmoid(h @ params["w2"] + params["b2"])      # (N, C)
    return sa * ca[:, :, None, None]


if __name__ == "__main__":
    key = jax.random.PRNGKey(0)
    k_x, k_x2, k_p = jax.random.split(key, 3)

    # Case 1: HW a multiple of 128 (single lane-dense tile per batch element).
    N, C, H, W = 2, 32, 16, 16  # C >= 16 so that C // 16 >= 1
    x = jax.random.normal(k_x, (N, C, H, W), jnp.float32)
    params = init_params(k_p, C)

    out = dual_attention_block(x, params)
    out = jax.block_until_ready(out)
    ref = reference_forward(x, params)
    assert out.shape == (N, C, H, W)
    assert jnp.allclose(out, ref, atol=1e-5, rtol=1e-5), "mismatch vs reference (aligned HW)"

    # Case 2: HW NOT a multiple of 128 — exercises the padded / masked-store
    # ragged last tile (the fallback removed per the perf review).
    H2 = W2 = 10
    x2 = jax.random.normal(k_x2, (N, C, H2, W2), jnp.float32)
    out2 = dual_attention_block(x2, params)
    out2 = jax.block_until_ready(out2)
    ref2 = reference_forward(x2, params)
    assert out2.shape == (N, C, H2, W2)
    assert jnp.allclose(out2, ref2, atol=1e-5, rtol=1e-5), "mismatch vs reference (ragged HW)"

    print("KERNEL_OK")
</pallas_src>

<mosaic_0001>
module attributes {stable_mosaic.version = 11 : i64} {
  func.func @dual_attention_kernel(%arg0: i32, %arg1: i32, %arg2: memref<1x32x256xf32, #tpu.memory_space<vmem>>, %arg3: memref<32x1xf32, #tpu.memory_space<vmem>>, %arg4: memref<1xf32, #tpu.memory_space<smem>>, %arg5: memref<1x32x1xf32, #tpu.memory_space<vmem>>, %arg6: memref<1x32x256xf32, #tpu.memory_space<vmem>>) attributes {dimension_semantics = [#tpu.dimension_semantics<parallel>, #tpu.dimension_semantics<parallel>], iteration_bounds = array<i64: 2, 1>, scalar_prefetch = 0 : i64, scratch_operands = 0 : i64, tpu.core_type = #tpu.core_type<tc>, window_params = [{transform_indices = @transform_0, window_bounds = array<i64: 1, 32, 256>}, {pipeline_mode = #tpu.pipeline_mode<synchronous>, transform_indices = @transform_1, window_bounds = array<i64: 32, 1>}, {transform_indices = @transform_2, window_bounds = array<i64: 1>}, {transform_indices = @transform_3, window_bounds = array<i64: 1, 32, 1>}, {transform_indices = @transform_4, window_bounds = array<i64: 1, 32, 256>}]} {
    %c0 = arith.constant 0 : index
    %c0_0 = arith.constant 0 : index
    %c0_1 = arith.constant 0 : index
    %0 = vector.load %arg2[%c0, %c0_0, %c0_1] : memref<1x32x256xf32, #tpu.memory_space<vmem>>, vector<1x32x256xf32>
    %1 = vector.shape_cast %0 : vector<1x32x256xf32> to vector<32x256xf32>
    %c0_2 = arith.constant 0 : index
    %c0_3 = arith.constant 0 : index
    %2 = vector.load %arg3[%c0_2, %c0_3] : memref<32x1xf32, #tpu.memory_space<vmem>>, vector<32x1xf32>
    %3 = vector.broadcast %2 : vector<32x1xf32> to vector<32x256xf32>
    %4 = arith.mulf %1, %3 : vector<32x256xf32>
    %cst = arith.constant dense<0.000000e+00> : vector<256xf32>
    %5 = vector.multi_reduction <add>, %4, %cst [0] : vector<32x256xf32> to vector<256xf32>
    %6 = vector.shape_cast %5 : vector<256xf32> to vector<1x256xf32>
    %c0_4 = arith.constant 0 : index
    %7 = memref.load %arg4[%c0_4] : memref<1xf32, #tpu.memory_space<smem>>
    %8 = vector.broadcast %7 : f32 to vector<1x256xf32>
    %9 = arith.addf %6, %8 : vector<1x256xf32>
    %10 = arith.negf %9 : vector<1x256xf32>
    %11 = math.exp %10 : vector<1x256xf32>
    %cst_5 = arith.constant 1.000000e+00 : f32
    %12 = vector.broadcast %cst_5 : f32 to vector<1x256xf32>
    %13 = arith.addf %12, %11 : vector<1x256xf32>
    %14 = arith.divf %12, %13 : vector<1x256xf32>
    %c0_6 = arith.constant 0 : index
    %c0_7 = arith.constant 0 : index
    %c0_8 = arith.constant 0 : index
    %15 = vector.load %arg5[%c0_6, %c0_7, %c0_8] : memref<1x32x1xf32, #tpu.memory_space<vmem>>, vector<1x32x1xf32>
    %16 = vector.shape_cast %15 : vector<1x32x1xf32> to vector<32x1xf32>
    %17 = vector.broadcast %14 : vector<1x256xf32> to vector<32x256xf32>
    %18 = arith.mulf %1, %17 : vector<32x256xf32>
    %19 = vector.broadcast %16 : vector<32x1xf32> to vector<32x256xf32>
    %20 = arith.mulf %18, %19 : vector<32x256xf32>
    %c0_9 = arith.constant 0 : index
    %c0_10 = arith.constant 0 : index
    %c0_11 = arith.constant 0 : index
    %21 = vector.load %arg6[%c0_9, %c0_10, %c0_11] : memref<1x32x256xf32, #tpu.memory_space<vmem>>, vector<1x32x256xf32>
    %22 = vector.shape_cast %21 : vector<1x32x256xf32> to vector<32x256xf32>
    %23 = vector.shape_cast %20 : vector<32x256xf32> to vector<1x32x256xf32>
    tpu.vector_store %arg6[%c0_9, %c0_10, %c0_11], %23 {strides = array<i32>} : memref<1x32x256xf32, #tpu.memory_space<vmem>>, vector<1x32x256xf32>,
    return
  }
  func.func @transform_0(%arg0: i32, %arg1: i32) -> (i32, i32, i32) {
    %c0_i32 = arith.constant 0 : i32
    %c0_i32_0 = arith.constant 0 : i32
    return %arg0, %c0_i32, %arg1 : i32, i32, i32
  }
  func.func @transform_1(%arg0: i32, %arg1: i32) -> (i32, i32) {
    %c0_i32 = arith.constant 0 : i32
    %c0_i32_0 = arith.constant 0 : i32
    %c0_i32_1 = arith.constant 0 : i32
    return %c0_i32, %c0_i32_0 : i32, i32
  }
  func.func @transform_2(%arg0: i32, %arg1: i32) -> i32 {
    %c0_i32 = arith.constant 0 : i32
    %c0_i32_0 = arith.constant 0 : i32
    return %c0_i32 : i32
  }
  func.func @transform_3(%arg0: i32, %arg1: i32) -> (i32, i32, i32) {
    %c0_i32 = arith.constant 0 : i32
    %c0_i32_0 = arith.constant 0 : i32
    %c0_i32_1 = arith.constant 0 : i32
    return %arg0, %c0_i32, %c0_i32_0 : i32, i32, i32
  }
  func.func @transform_4(%arg0: i32, %arg1: i32) -> (i32, i32, i32) {
    %c0_i32 = arith.constant 0 : i32
    %c0_i32_0 = arith.constant 0 : i32
    return %arg0, %c0_i32, %arg1 : i32, i32, i32
  }
}

</mosaic_0001>

<llo_original>
// kernel: dual_attention_block.1
$region0: #{dual_attention_block.1}
  #allocation0 [shape = 'u32[]', space=smem, size = 0x4, offset = 0x4, fixed_abs, tag = 'smem constant byte address 0x4 - core index']
  #allocation1 [shape = 'u32[72,128]{1,0:T(1,128)}', space=vmem, size = 0x9000, scoped, tag = 'internal scratch']
  #allocation2 [shape = 'f32[1]{0:T(128)S(6)}', space=smem, size = 0x200, scoped, tag = 'scoped memory for dual_attention_block.1']
  %s0 = inlined_call_operand.vmem [shape: f32[2,32,256], index: 0, kind: input, shape index: {}]
  %s1 = inlined_call_operand.vmem [shape: f32[32,1], index: 1, kind: input, shape index: {}]
  %s2 = inlined_call_operand.<no memory space> [shape: f32[1], index: 2, kind: input, shape index: {}]
  %s3 = inlined_call_operand.vmem [shape: f32[2,32,1], index: 3, kind: input, shape index: {}]
  %s4 = inlined_call_operand.vmem [shape: f32[2,32,256], index: 4, kind: output, shape index: {}]
  %s5 = sld [smem:[#allocation0]]
  $region49: #{dual_attention_block.1} parent=0
    _
  %s7 = ssub.s32 1, %s5
  %s8 = scalar_select 0, %s7, %s5
  %9 = sst [smem:[#allocation2]] %s2
  loop: start=0, step=1, limit=4
  $region2: #{dual_attention_block.1} parent=0 // loop_pre_header
    _
  $region3: #{dual_attention_block.1} parent=0 // loop_header
    %s11 = sphi 0, %s15
    %p12 = scmp.ge.s32.totalorder %s11, 4
    %s18 = sphi 0, %s30
    %s19 = sphi 0, %s26
    %s20 = sphi 0, %s18
    %s21 = sphi 0, %s19
    %s22 = sphi 0, %s20
    %s23 = sphi 0, %s21
    %s35 = sphi 0, %s37
    %s38 = sphi 0, %s35
    %s39 = sphi 0, %s38
    %s55 = sphi 0, %s39
    %s59 = sphi 0, %s59
    %s61 = sphi 0, %s59
    %s62 = sphi 0, %s61
    %s76 = sphi 0, %s62
    %s80 = sphi 0, %s80
    %s82 = sphi 0, %s80
    %s83 = sphi 0, %s82
    %s97 = sphi 0, %s83
    %s103 = sphi 0, %s105
    %s106 = sphi 0, %s103
    %s107 = sphi 0, %s106
    %s123 = sphi 0, %s107
    %s131 = sphi 0, %s133
    %s134 = sphi 0, %s131
    %s135 = sphi 0, %s134
    %s151 = sphi 0, %s135
  $region4: #{dual_attention_block.1} parent=0 // loop_header_branch
    %14 = sbr.rel (%p12) target = $region8
  $region5: #{dual_attention_block.1} parent=0 // loop_body
    %s16 = ssub.s32 %s11, 1
    %s17 = ssub.s32 %s11, 2
    %s24 = sadd.s32 1, %s19
    %p25 = scmp.ge.s32.totalorder %s24, 1
    %s26 = scalar_select %p25, 0, %s24
    %s27 = sadd.s32 1, %s18
    %s28 = scalar_select %p25, %s27, %s18
    %p29 = scmp.ge.s32.totalorder %s28, 2
    %s30 = scalar_select %p29, 0, %s28
    %s31 = ssub.s32 %s18, %s30
    %s32 = ssub.s32 %s19, %s26
    %s33 = sor.u32 %s31, %s32
    %p34 = scmp.eq.s32.totalorder %s33, 0
    %s36 = sadd.s32 %s35, 1
    %s37 = scalar_select %p34, %s35, %s36
    %p40 = pneg %p34
    %p41 = scmp.eq.s32.totalorder %s11, 1
    %p42 = por %p40, %p41
    %p43 = scmp.ne.s32.totalorder %s35, %s38
    %p44 = scmp.eq.s32.totalorder %s11, 0
    %p45 = por %p43, %p44
    %p46 = scmp.ne.s32.totalorder %s35, %s38
    %p47 = scmp.eq.s32.totalorder %s16, 1
    %p48 = por %p46, %p47
    %p49 = scmp.ne.s32.totalorder %s38, %s39
    %p50 = scmp.eq.s32.totalorder %s16, 0
    %p51 = por %p49, %p50
    %p52 = scmp.ne.s32.totalorder %s38, %s39
    %p53 = scmp.eq.s32.totalorder %s17, 1
    %p54 = por %p52, %p53
    %p56 = scmp.ne.s32.totalorder %s39, %s55
    %p57 = scmp.eq.s32.totalorder %s17, 0
    %p58 = por %p56, %p57
    %s60 = sadd.s32 %s59, 1
    %p63 = scmp.eq.s32.totalorder %s11, 1
    %p64 = scmp.ne.s32.totalorder %s59, %s61
    %p65 = scmp.eq.s32.totalorder %s11, 0
    %p66 = por %p64, %p65
    %p67 = scmp.ne.s32.totalorder %s59, %s61
    %p68 = scmp.eq.s32.totalorder %s16, 1
    %p69 = por %p67, %p68
    %p70 = scmp.ne.s32.totalorder %s61, %s62
    %p71 = scmp.eq.s32.totalorder %s16, 0
    %p72 = por %p70, %p71
    %p73 = scmp.ne.s32.totalorder %s61, %s62
    %p74 = scmp.eq.s32.totalorder %s17, 1
    %p75 = por %p73, %p74
    %p77 = scmp.ne.s32.totalorder %s62, %s76
    %p78 = scmp.eq.s32.totalorder %s17, 0
    %p79 = por %p77, %p78
    %s81 = sadd.s32 %s80, 1
    %p84 = scmp.eq.s32.totalorder %s11, 1
    %p85 = scmp.ne.s32.totalorder %s80, %s82
    %p86 = scmp.eq.s32.totalorder %s11, 0
    %p87 = por %p85, %p86
    %p88 = scmp.ne.s32.totalorder %s80, %s82
    %p89 = scmp.eq.s32.totalorder %s16, 1
    %p90 = por %p88, %p89
    %p91 = scmp.ne.s32.totalorder %s82, %s83
    %p92 = scmp.eq.s32.totalorder %s16, 0
    %p93 = por %p91, %p92
    %p94 = scmp.ne.s32.totalorder %s82, %s83
    %p95 = scmp.eq.s32.totalorder %s17, 1
    %p96 = por %p94, %p95
    %p98 = scmp.ne.s32.totalorder %s83, %s97
    %p99 = scmp.eq.s32.totalorder %s17, 0
    %p100 = por %p98, %p99
    %s101 = ssub.s32 %s18, %s30
    %p102 = scmp.eq.s32.totalorder %s101, 0
    %s104 = sadd.s32 %s103, 1
    %s105 = scalar_select %p102, %s103, %s104
    %p108 = pneg %p102
    %p109 = scmp.eq.s32.totalorder %s11, 1
    %p110 = por %p108, %p109
    %p111 = scmp.ne.s32.totalorder %s103, %s106
    %p112 = scmp.eq.s32.totalorder %s11, 0
    %p113 = por %p111, %p112
    %p114 = scmp.ne.s32.totalorder %s103, %s106
    %p115 = scmp.eq.s32.totalorder %s16, 1
    %p116 = por %p114, %p115
    %p117 = scmp.ne.s32.totalorder %s106, %s107
    %p118 = scmp.eq.s32.totalorder %s16, 0
    %p119 = por %p117, %p118
    %p120 = scmp.ne.s32.totalorder %s106, %s107
    %p121 = scmp.eq.s32.totalorder %s17, 1
    %p122 = por %p120, %p121
    %p124 = scmp.ne.s32.totalorder %s107, %s123
    %p125 = scmp.eq.s32.totalorder %s17, 0
    %p126 = por %p124, %p125
    %s127 = ssub.s32 %s18, %s30
    %s128 = ssub.s32 %s19, %s26
    %s129 = sor.u32 %s127, %s128
    %p130 = scmp.eq.s32.totalorder %s129, 0
    %s132 = sadd.s32 %s131, 1
    %s133 = scalar_select %p130, %s131, %s132
    %p136 = pneg %p130
    %p137 = scmp.eq.s32.totalorder %s11, 1
    %p138 = por %p136, %p137
    %p139 = scmp.ne.s32.totalorder %s131, %s134
    %p140 = scmp.eq.s32.totalorder %s11, 0
    %p141 = por %p139, %p140
    %p142 = scmp.ne.s32.totalorder %s131, %s134
    %p143 = scmp.eq.s32.totalorder %s16, 1
    %p144 = por %p142, %p143
    %p145 = scmp.ne.s32.totalorder %s134, %s135
    %p146 = scmp.eq.s32.totalorder %s16, 0
    %p147 = por %p145, %p146
    %p148 = scmp.ne.s32.totalorder %s134, %s135
    %p149 = scmp.eq.s32.totalorder %s17, 1
    %p150 = por %p148, %p149
    %p152 = scmp.ne.s32.totalorder %s135, %s151
    %p153 = scmp.eq.s32.totalorder %s17, 0
    %p154 = por %p152, %p153
    %p155 = scmp.le.s32.totalorder 1, %s11
    %p156 = scmp.lt.s32.totalorder %s11, 3
    %p157 = pnand %p155, %p156
    %p158 = pneg %p157
    // Predicated region
    $region9: #{dual_attention_block.1} parent=5 // pred_check
      _
    $region10: #{dual_attention_block.1} parent=5 // pred_check_branch
      %160 = sbr.rel (%p157) target = $region12
    $region11: #{dual_attention_block.1} parent=5 // pred_region
      %s161 = ssub.s32 %s11, 1
      // Predicated region
      $region13: #{dual_attention_block.1} parent=11 // pred_check
        %p162 = pneg %p72
      $region14: #{dual_attention_block.1} parent=11 // pred_check_branch
        %164 = sbr.rel (%p162) target = $region16
      $region15: #{dual_attention_block.1} parent=11 // pred_region
        _
      $region16: #{dual_attention_block.1} parent=11 // pred_fallthru
        _
      // Predicated region
      $region17: #{dual_attention_block.1} parent=11 // pred_check
        %p165 = pneg %p93
      $region18: #{dual_attention_block.1} parent=11 // pred_check_branch
        %167 = sbr.rel (%p165) target = $region20
      $region19: #{dual_attention_block.1} parent=11 // pred_region
        _
      $region20: #{dual_attention_block.1} parent=11 // pred_fallthru
        _
    $region12: #{dual_attention_block.1} parent=5 // pred_fallthru
      _
    %p168 = scmp.lt.s32.totalorder %s11, 2
    // Predicated region
    $region21: #{dual_attention_block.1} parent=5 // pred_check
      %p169 = pneg %p168
    $region22: #{dual_attention_block.1} parent=5 // pred_check_branch
      %171 = sbr.rel (%p169) target = $region24
    $region23: #{dual_attention_block.1} parent=5 // pred_region
      // Predicated region
      $region25: #{dual_attention_block.1} parent=23 // pred_check
        %p172 = pneg %p45
      $region26: #{dual_attention_block.1} parent=23 // pred_check_branch
        %174 = sbr.rel (%p172) target = $region28
      $region27: #{dual_attention_block.1} parent=23 // pred_region
        %s175 = smul.u32 2, %s19
        %p176 = scmp.lt.s32.totalorder %s18, 1
        %s177 = scalar_select %p176, %s18, 1
        %p178 = scmp.lt.s32.totalorder %s175, 1
        %s179 = scalar_select %p178, %s175, 1
        %s180 = smul.addr %s177, 8
        %s181 = sadd.s32 %s179, %s180
        %s182 = smul.addr %s181, 8
        %s183 = scalar_lea.vmem %s0, %s182
        %s184 = smul.u32 2, %s19
      $region28: #{dual_attention_block.1} parent=23 // pred_fallthru
        _
      // Predicated region
      $region29: #{dual_attention_block.1} parent=23 // pred_check
        %p185 = pneg %p113
      $region30: #{dual_attention_block.1} parent=23 // pred_check_branch
        %187 = sbr.rel (%p185) target = $region32
      $region31: #{dual_attention_block.1} parent=23 // pred_region
        %p188 = scmp.lt.s32.totalorder %s18, 1
        %s189 = scalar_select %p188, %s18, 1
        %s190 = smul.addr %s189, 4
        %s191 = smul.addr %s190, 8
        %s192 = scalar_lea.vmem %s3, %s191
      $region32: #{dual_attention_block.1} parent=23 // pred_fallthru
        _
    $region24: #{dual_attention_block.1} parent=5 // pred_fallthru
      _
    %p193 = scmp.le.s32.totalorder 1, %s11
    %p194 = scmp.lt.s32.totalorder %s11, 3
    %p195 = pnand %p193, %p194
    %p196 = pneg %p195
    // Predicated region
    $region33: #{dual_attention_block.1} parent=5 // pred_check
      _
    $region34: #{dual_attention_block.1} parent=5 // pred_check_branch
      %198 = sbr.rel (%p195) target = $region36
    $region35: #{dual_attention_block.1} parent=5 // pred_region
      %s199 = ssub.s32 %s11, 1
      %s200 = smul.u32 2, %s21
      %p201 = scmp.lt.s32.totalorder %s20, 1
      %s202 = scalar_select %p201, %s20, 1
      %p203 = scmp.lt.s32.totalorder %s200, 1
      %s204 = scalar_select %p203, %s200, 1
      %s205 = smul.addr %s202, 8
      %s206 = sadd.s32 %s204, %s205
      %s207 = smul.addr %s206, 8
      %s208 = scalar_lea.vmem %s0, %s207
      %p209 = pneg %p51
      %p210 = pneg %p48
      %p211 = pneg %p72
      %p212 = pneg %p69
      %p213 = pneg %p93
      %p214 = pneg %p90
      %p215 = scmp.lt.s32.totalorder %s20, 1
      %s216 = scalar_select %p215, %s20, 1
      %s217 = smul.addr %s216, 4
      %s218 = smul.addr %s217, 8
      %s219 = scalar_lea.vmem %s3, %s218
      %p220 = pneg %p119
      %p221 = pneg %p116
      %p222 = pneg %p147
      %p223 = pneg %p144
      %s224 = smul.u32 2, %s21
      %p225 = scmp.lt.s32.totalorder %s20, 1
      %s226 = scalar_select %p225, %s20, 1
      %p227 = scmp.lt.s32.totalorder %s224, 1
      %s228 = scalar_select %p227, %s224, 1
      %s229 = smul.addr %s226, 8
      %s230 = sadd.s32 %s228, %s229
      %s231 = smul.addr %s230, 8
      %s232 = scalar_lea.vmem %s4, %s231
      %s233 = smul.u32 2, %s21
      %p234 = scmp.lt.s32.totalorder %s20, 1
      %s235 = scalar_select %p234, %s20, 1
      %p236 = scmp.lt.s32.totalorder %s233, 1
      %s237 = scalar_select %p236, %s233, 1
      %s238 = smul.addr %s235, 8
      %s239 = sadd.s32 %s237, %s238
      %s240 = smul.addr %s239, 8
      %s241 = scalar_lea.vmem %s0, %s240
      %s242 = smul.u32 2, %s21
      %p243 = scmp.lt.s32.totalorder %s20, 1
      %s244 = scalar_select %p243, %s20, 1
      %s245 = smul.addr %s244, 4
      %s246 = smul.addr %s245, 8
      %s247 = scalar_lea.vmem %s3, %s246
      %s248 = smul.u32 2, %s21
      %p249 = scmp.lt.s32.totalorder %s20, 1
      %s250 = scalar_select %p249, %s20, 1
      %p251 = scmp.lt.s32.totalorder %s248, 1
      %s252 = scalar_select %p251, %s248, 1
      %s253 = smul.addr %s250, 8
      %s254 = sadd.s32 %s252, %s253
      %s255 = smul.addr %s254, 8
      %s256 = scalar_lea.vmem %s4, %s255
      %s257 = smul.u32 2, %s21
      %v258 = vld [vmem:[%s241] sm:$0xff]
      %v259 = vld [vmem:[%s241 + $0x8] sm:$0xff]
      %v260 = vld [vmem:[%s241 + $0x10] sm:$0xff]
      %v261 = vld [vmem:[%s241 + $0x18] sm:$0xff]
      %v262 = vld [vmem:[%s241 + $0x20] sm:$0xff]
      %v263 = vld [vmem:[%s241 + $0x28] sm:$0xff]
      %v264 = vld [vmem:[%s241 + $0x30] sm:$0xff]
      %v265 = vld [vmem:[%s241 + $0x38] sm:$0xff]
      %v266 = vld [vmem:[%s1] sm:$0xff]
      %v267 = vld [vmem:[%s1 + $0x8] sm:$0xff]
      %v268 = vld [vmem:[%s1 + $0x10] sm:$0xff]
      %v269 = vld [vmem:[%s1 + $0x18] sm:$0xff]
      %271 = vset.pattern.permute.xlu0 0
      %272 = vperm.xlu0 %271, %v266
      %v273 = vpop.permute.xlu0 %272
      %276 = vset.pattern.permute.xlu0 0
      %277 = vperm.xlu0 %276, %v267
      %v278 = vpop.permute.xlu0 %277
      %281 = vset.pattern.permute.xlu0 0
      %282 = vperm.xlu0 %281, %v268
      %v283 = vpop.permute.xlu0 %282
      %286 = vset.pattern.permute.xlu0 0
      %287 = vperm.xlu0 %286, %v269
      %v288 = vpop.permute.xlu0 %287
      %v290 = vmul.f32 %v258, %v273
      %v291 = vmul.f32 %v259, %v273
      %v292 = vmul.f32 %v260, %v278
      %v293 = vmul.f32 %v261, %v278
      %v294 = vmul.f32 %v262, %v283
      %v295 = vmul.f32 %v263, %v283
      %v296 = vmul.f32 %v264, %v288
      %v297 = vmul.f32 %v265, %v288
      %v298 = vadd.f32 %v290, %v292
      %v299 = vadd.f32 %v298, %v294
      %v300 = vadd.f32 %v299, %v296
      %v301 = vrot.slane %v300, 4
      %v302 = vadd.f32 %v300, %v301
      %v303 = vrot.slane %v302, 2
      %v304 = vadd.f32 %v302, %v303
      %v305 = vrot.slane %v304, 1
      %v306 = vadd.f32 %v304, %v305
      %v307 = vadd.f32 %v291, %v293
      %v308 = vadd.f32 %v307, %v295
      %v309 = vadd.f32 %v308, %v297
      %v310 = vrot.slane %v309, 4
      %v311 = vadd.f32 %v309, %v310
      %v312 = vrot.slane %v311, 2
      %v313 = vadd.f32 %v311, %v312
      %v314 = vrot.slane %v313, 1
      %v315 = vadd.f32 %v313, %v314
      %s316 = sld [smem:[#allocation2]]
      %v317 = vstv %s316
      %v318 = vadd.f32 %v306, %v317
      %v319 = vadd.f32 %v315, %v317
      %v320 = vxor.u32 %v318, 2147483648
      %v321 = vxor.u32 %v319, 2147483648
      %v322 = vmul.f32 %v320, 1.442695
      %v323 = vpow.pop %v322
      %v324 = vmul.f32 %v321, 1.442695
      %v325 = vpow.pop %v324
      %v326 = vadd.f32 %v323, 1.0
      %v327 = vadd.f32 %v325, 1.0
      %v328 = vrcp.pop %v326
      %v329 = vmul.f32 %v326, %v328
      %v330 = vsub.f32 1.0, %v329
      %v331 = vmul.f32 %v328, %v330
      %v332 = vadd.f32 %v328, %v331
      %vm333 = vweird.f32 %v326
      %vm334 = vweird.f32 %v328
      %vm335 = vmor %vm333, %vm334
      %v336 = vsel %vm335, %v328, %v332
      %v337 = vand.u32 2147483647, %v326
      %vm338 = vcmp.eq.f32.partialorder %v337, 8.507059e+37
      %v339 = vand.u32 %v326, 2147483648
      %v340 = vor.u32 1.1754944e-38, %v339
      %v341 = vsel %vm338, %v340, %v336
      %v342 = vmul.f32 1.0, %v341
      %v343 = vrcp.pop %v327
      %v344 = vmul.f32 %v327, %v343
      %v345 = vsub.f32 1.0, %v344
      %v346 = vmul.f32 %v343, %v345
      %v347 = vadd.f32 %v343, %v346
      %vm348 = vweird.f32 %v327
      %vm349 = vweird.f32 %v343
      %vm350 = vmor %vm348, %vm349
      %v351 = vsel %vm350, %v343, %v347
      %v352 = vand.u32 2147483647, %v327
      %vm353 = vcmp.eq.f32.partialorder %v352, 8.507059e+37
      %v354 = vand.u32 %v327, 2147483648
      %v355 = vor.u32 1.1754944e-38, %v354
      %v356 = vsel %vm353, %v355, %v351
      %v357 = vmul.f32 1.0, %v356
      %v358 = vld [vmem:[%s247] sm:$0xff]
      %v359 = vld [vmem:[%s247 + $0x8] sm:$0xff]
      %v360 = vld [vmem:[%s247 + $0x10] sm:$0xff]
      %v361 = vld [vmem:[%s247 + $0x18] sm:$0xff]
      %v362 = vmul.f32 %v258, %v342
      %v363 = vmul.f32 %v259, %v357
      %v364 = vmul.f32 %v260, %v342
      %v365 = vmul.f32 %v261, %v357
      %v366 = vmul.f32 %v262, %v342
      %v367 = vmul.f32 %v263, %v357
      %v368 = vmul.f32 %v264, %v342
      %v369 = vmul.f32 %v265, %v357
      %371 = vset.pattern.permute.xlu0 0
      %372 = vperm.xlu0 %371, %v358
      %v373 = vpop.permute.xlu0 %372
      %376 = vset.pattern.permute.xlu0 0
      %377 = vperm.xlu0 %376, %v359
      %v378 = vpop.permute.xlu0 %377
      %381 = vset.pattern.permute.xlu0 0
      %382 = vperm.xlu0 %381, %v360
      %v383 = vpop.permute.xlu0 %382
      %386 = vset.pattern.permute.xlu0 0
      %387 = vperm.xlu0 %386, %v361
      %v388 = vpop.permute.xlu0 %387
      %v390 = vmul.f32 %v362, %v373
      %v391 = vmul.f32 %v363, %v373
      %v392 = vmul.f32 %v364, %v378
      %v393 = vmul.f32 %v365, %v378
      %v394 = vmul.f32 %v366, %v383
      %v395 = vmul.f32 %v367, %v383
      %v396 = vmul.f32 %v368, %v388
      %v397 = vmul.f32 %v369, %v388
      %398 = vst [vmem:[%s256] sm:$0xff] %v390
      %399 = vst [vmem:[%s256 + $0x8] sm:$0xff] %v391
      %400 = vst [vmem:[%s256 + $0x10] sm:$0xff] %v392
      %401 = vst [vmem:[%s256 + $0x18] sm:$0xff] %v393
      %402 = vst [vmem:[%s256 + $0x20] sm:$0xff] %v394
      %403 = vst [vmem:[%s256 + $0x28] sm:$0xff] %v395
      %404 = vst [vmem:[%s256 + $0x30] sm:$0xff] %v396
      %405 = vst [vmem:[%s256 + $0x38] sm:$0xff] %v397
      %s406 = smul.u32 2, %s21
      %p407 = scmp.lt.s32.totalorder %s20, 1
      %s408 = scalar_select %p407, %s20, 1
      %p409 = scmp.lt.s32.totalorder %s406, 1
      %s410 = scalar_select %p409, %s406, 1
      %s411 = smul.addr %s408, 8
      %s412 = sadd.s32 %s410, %s411
      %s413 = smul.addr %s412, 8
      %s414 = scalar_lea.vmem %s4, %s413
      // Predicated region
      $region37: #{dual_attention_block.1} parent=35 // pred_check
        %p415 = pneg %p144
      $region38: #{dual_attention_block.1} parent=35 // pred_check_branch
        %417 = sbr.rel (%p415) target = $region40
      $region39: #{dual_attention_block.1} parent=35 // pred_region
        %s418 = smul.u32 2, %s21
      $region40: #{dual_attention_block.1} parent=35 // pred_fallthru
        _
    $region36: #{dual_attention_block.1} parent=5 // pred_fallthru
      _
    %p419 = scmp.le.s32.totalorder 2, %s11
    // Predicated region
    $region41: #{dual_attention_block.1} parent=5 // pred_check
      %p420 = pneg %p419
    $region42: #{dual_attention_block.1} parent=5 // pred_check_branch
      %422 = sbr.rel (%p420) target = $region44
    $region43: #{dual_attention_block.1} parent=5 // pred_region
      %s423 = ssub.s32 %s11, 2
      // Predicated region
      $region45: #{dual_attention_block.1} parent=43 // pred_check
        %p424 = pneg %p150
      $region46: #{dual_attention_block.1} parent=43 // pred_check_branch
        %426 = sbr.rel (%p424) target = $region48
      $region47: #{dual_attention_block.1} parent=43 // pred_region
        %s427 = smul.u32 2, %s23
        %p428 = scmp.lt.s32.totalorder %s22, 1
        %s429 = scalar_select %p428, %s22, 1
        %p430 = scmp.lt.s32.totalorder %s427, 1
        %s431 = scalar_select %p430, %s427, 1
        %s432 = smul.addr %s429, 8
        %s433 = sadd.s32 %s431, %s432
        %s434 = smul.addr %s433, 8
        %s435 = scalar_lea.vmem %s4, %s434
      $region48: #{dual_attention_block.1} parent=43 // pred_fallthru
        _
    $region44: #{dual_attention_block.1} parent=5 // pred_fallthru
      _
  $region6: #{dual_attention_block.1} parent=0 // loop_footer
    %s15 = sadd.s32 1, %s11
  $region7: #{dual_attention_block.1} parent=0 // loop_footer_branch
    %10 = sbr.rel target = $region3
  $region8: #{dual_attention_block.1} parent=0 // loop_exit
    _

</llo_original>
